<compile_context>
chip_gen: v7x
topology: tpu7x:2x2x1
jax: 0.10.0
libtpu: 0.0.40
codegen_flags: <defaults>
</compile_context>

<pallas_src>
import jax
import jax.numpy as jnp
from jax.experimental import pallas as pl
from jax.experimental.pallas import tpu as pltpu


def _nearest_upsample_kernel(x_ref, sel_ref, o_ref):
    # x_ref: (TM, W)   sel_ref: (W, s*Wo)   o_ref: (TM, s*Wo)
    o_ref[...] = jnp.dot(
        x_ref[...], sel_ref[...], preferred_element_type=jnp.float32
    ).astype(o_ref.dtype)


def model_forward(x1):
    """Equivalent of Model.forward: nearest upsample by factor s = x1.shape[-1]."""
    N, C, H, W = x1.shape
    s = W                      # scale_factor = x1.size()[-1]
    Ho, Wo = H * s, W * s

    if not jnp.issubdtype(x1.dtype, jnp.floating):
        # TODO(synk): integer inputs skip the MXU path (matmul round-trip loses
        # precision for |v| > 2^24); plain replication is exact.
        return jnp.repeat(jnp.repeat(x1, s, axis=2), s, axis=3)

    M = N * C * H              # flattened "row" dimension
    L = s * Wo                 # lane dim of the flat output (= s * W * s)

    # Selection matrix: out_flat[m, i] = x_flat[m, (i % Wo) // s]
    col = (jnp.arange(L) % Wo) // s                       # (L,)
    sel = (jnp.arange(W)[:, None] == col[None, :]).astype(x1.dtype)  # (W, L)

    x_flat = x1.reshape(M, W)

    # Adaptive row tiling: keep each output block <= ~4 MiB (double-buffered -> 8 MiB).
    itemsize = jnp.dtype(x1.dtype).itemsize
    max_out_block_bytes = 4 * 1024 * 1024
    tm_cap = max(8, (max_out_block_bytes // (L * itemsize)) // 8 * 8)
    TM = M if M <= tm_cap else tm_cap
    grid = (pl.cdiv(M, TM),)

    cost = pl.CostEstimate(
        flops=2 * M * W * L,
        transcendentals=0,
        bytes_accessed=(M * W + W * L + M * L) * itemsize,
    )

    out_flat = pl.pallas_call(
        _nearest_upsample_kernel,
        out_shape=jax.ShapeDtypeStruct((M, L), x1.dtype),
        grid=grid,
        in_specs=[
            pl.BlockSpec((TM, W), lambda i: (i, 0)),
            pl.BlockSpec((W, L), lambda i: (0, 0)),   # grid-invariant, stays resident
        ],
        out_specs=pl.BlockSpec((TM, L), lambda i: (i, 0)),
        compiler_params=pltpu.CompilerParams(
            dimension_semantics=("parallel",),
        ),
        cost_estimate=cost,
    )(x_flat, sel)

    # (N*C*H, s*Wo) -> (N, C, H, s, Wo) -> (N, C, H*s, W*s)
    return out_flat.reshape(N, C, Ho, Wo)


if __name__ == "__main__":
    key = jax.random.PRNGKey(0)

    # Shape from the PyTorch spec: x1 = torch.randn(1, 2, 4, 4)
    x1 = jax.random.normal(key, (1, 2, 4, 4), dtype=jnp.float32)
    x4 = jax.block_until_ready(model_forward(x1))
    ref = jnp.repeat(jnp.repeat(x1, 4, axis=2), 4, axis=3)
    assert x4.shape == (1, 2, 16, 16), x4.shape
    assert jnp.allclose(x4, ref), "mismatch vs reference nearest upsample (small)"

    # A second, larger case to exercise the batched / lane-dense tiling path.
    key2 = jax.random.PRNGKey(1)
    xb = jax.random.normal(key2, (2, 4, 16, 16), dtype=jnp.float32)
    yb = jax.block_until_ready(model_forward(xb))
    refb = jnp.repeat(jnp.repeat(xb, 16, axis=2), 16, axis=3)
    assert yb.shape == (2, 4, 256, 256), yb.shape
    assert jnp.allclose(yb, refb), "mismatch vs reference nearest upsample (large)"

    print("KERNEL_OK")
</pallas_src>

<mosaic_0001>
module attributes {stable_mosaic.version = 11 : i64} {
  func.func @_nearest_upsample_kernel(%arg0: i32, %arg1: memref<8x4xf32, #tpu.memory_space<vmem>>, %arg2: memref<4x64xf32, #tpu.memory_space<vmem>>, %arg3: memref<8x64xf32, #tpu.memory_space<vmem>>) attributes {dimension_semantics = [#tpu.dimension_semantics<parallel>], iteration_bounds = array<i64: 1>, scalar_prefetch = 0 : i64, scratch_operands = 0 : i64, tpu.core_type = #tpu.core_type<tc>, window_params = [{transform_indices = @transform_0, window_bounds = array<i64: 8, 4>}, {pipeline_mode = #tpu.pipeline_mode<synchronous>, transform_indices = @transform_1, window_bounds = array<i64: 4, 64>}, {transform_indices = @transform_2, window_bounds = array<i64: 8, 64>}]} {
    %c0 = arith.constant 0 : index
    %c0_0 = arith.constant 0 : index
    %0 = vector.load %arg1[%c0, %c0_0] : memref<8x4xf32, #tpu.memory_space<vmem>>, vector<8x4xf32>
    %c0_1 = arith.constant 0 : index
    %c0_2 = arith.constant 0 : index
    %1 = vector.load %arg2[%c0_1, %c0_2] : memref<4x64xf32, #tpu.memory_space<vmem>>, vector<4x64xf32>
    %cst = arith.constant dense<0.000000e+00> : vector<8x64xf32>
    %2 = tpu.matmul %0, %1, %cst {dimension_numbers = #tpu.dot_dimension_numbers<[1], [0], [0], [1], [0, 0, 1, 1], [], []>} : vector<8x4xf32>, vector<4x64xf32>, vector<8x64xf32> -> vector<8x64xf32>
    %c0_3 = arith.constant 0 : index
    %c0_4 = arith.constant 0 : index
    %3 = vector.load %arg3[%c0_3, %c0_4] : memref<8x64xf32, #tpu.memory_space<vmem>>, vector<8x64xf32>
    tpu.vector_store %arg3[%c0_3, %c0_4], %2 {strides = array<i32>} : memref<8x64xf32, #tpu.memory_space<vmem>>, vector<8x64xf32>,
    return
  }
  func.func @transform_0(%arg0: i32) -> (i32, i32) {
    %c0_i32 = arith.constant 0 : i32
    %c0_i32_0 = arith.constant 0 : i32
    return %arg0, %c0_i32 : i32, i32
  }
  func.func @transform_1(%arg0: i32) -> (i32, i32) {
    %c0_i32 = arith.constant 0 : i32
    %c0_i32_0 = arith.constant 0 : i32
    %c0_i32_1 = arith.constant 0 : i32
    return %c0_i32, %c0_i32_0 : i32, i32
  }
  func.func @transform_2(%arg0: i32) -> (i32, i32) {
    %c0_i32 = arith.constant 0 : i32
    %c0_i32_0 = arith.constant 0 : i32
    return %arg0, %c0_i32 : i32, i32
  }
}

</mosaic_0001>

<llo_original>
// kernel: tpu_custom_call.1
$region0: #{tpu_custom_call.1}
  #allocation0 [shape = 'u32[]', space=smem, size = 0x4, offset = 0x4, fixed_abs, tag = 'smem constant byte address 0x4 - core index']
  #allocation1 [shape = 'u32[144,128]{1,0:T(1,128)}', space=vmem, size = 0x12000, scoped, tag = 'internal scratch']
  %s0 = inlined_call_operand.vmem [shape: f32[8,4], index: 0, kind: input, shape index: {}]
  %s1 = inlined_call_operand.vmem [shape: f32[4,64], index: 1, kind: input, shape index: {}]
  %s2 = inlined_call_operand.hbm [shape: f32[8,64], index: 2, kind: output, shape index: {}]
  %s3 = sld [smem:[#allocation0]]
  $region18: #{tpu_custom_call.1} parent=0
    _
  %s5 = ssub.s32 1, %s3
  %s6 = scalar_select 0, %s5, %s3
  $region1: #{tpu_custom_call.1} parent=0
    #allocation2 [shape = 'u8[4096]{0}', space=vmem, size = 0x1000, scoped, tag = 'output window, operand 0, single buffered']
    #allocation3 [shape = 's32[1]{0}', space=sflag, size = 0x4, scoped, tag = 'scoped memory for tpu_custom_call.1']
    %7 = vsyncpa [#allocation3], 0
    // Predicated region
    $region2: #{tpu_custom_call.1} parent=1 // pred_check
      _
    $region3: #{tpu_custom_call.1} parent=1 // pred_check_branch
      %9 = sbr.rel (0) target = $region5
    $region4: #{tpu_custom_call.1} parent=1 // pred_region
      _
    $region5: #{tpu_custom_call.1} parent=1 // pred_fallthru
      _
    // Predicated region
    $region6: #{tpu_custom_call.1} parent=1 // pred_check
      _
    $region7: #{tpu_custom_call.1} parent=1 // pred_check_branch
      %11 = sbr.rel (0) target = $region9
    $region8: #{tpu_custom_call.1} parent=1 // pred_region
      _
    $region9: #{tpu_custom_call.1} parent=1 // pred_fallthru
      _
    %v12 = vld [vmem:[%s0] sm:$0xff]
    %v13 = vld [vmem:[%s1] sm:$0xf]
    %vm14 = vcmask 31744
    %v16 = vsel %vm14, %v12, 0
    %vm18 = vcmask 1043456
    %v20 = vsel %vm18, %v13, 0
    %22 = vmatprep.subr.mxu0 0.0
    %23 = vmatpush1.msra.mxu0 %v20
    %24 = vmatprep.subr.mxu0 0.0
    %25 = vmatpush1.msra.mxu0 0.0
    %26 = vmatprep.subr.mxu0 0.0
    %27 = vmatpush1.msra.mxu0 0.0
    %28 = vmatprep.subr.mxu0 0.0
    %29 = vmatpush1.msra.mxu0 0.0
    %30 = vmatprep.subr.mxu0 0.0
    %31 = vmatpush1.msra.mxu0 0.0
    %32 = vmatprep.subr.mxu0 0.0
    %33 = vmatpush1.msra.mxu0 0.0
    %34 = vmatprep.subr.mxu0 0.0
    %35 = vmatpush1.msra.mxu0 0.0
    %36 = vmatprep.subr.mxu0 0.0
    %37 = vmatpush1.msra.mxu0 0.0
    %38 = vmatprep.subr.mxu0 0.0
    %39 = vmatpush1.msra.mxu0 0.0
    %40 = vmatprep.subr.mxu0 0.0
    %41 = vmatpush1.msra.mxu0 0.0
    %42 = vmatprep.subr.mxu0 0.0
    %43 = vmatpush1.msra.mxu0 0.0
    %44 = vmatprep.subr.mxu0 0.0
    %45 = vmatpush1.msra.mxu0 0.0
    %46 = vmatprep.subr.mxu0 0.0
    %47 = vmatpush1.msra.mxu0 0.0
    %48 = vmatprep.subr.mxu0 0.0
    %49 = vmatpush1.msra.mxu0 0.0
    %50 = vmatprep.subr.mxu0 0.0
    %51 = vmatpush1.msra.mxu0 0.0
    %52 = vmatprep.subr.mxu0 0.0
    %53 = vmatpush1.msra.mxu0 0.0
    %54 = vmatprep.subr.mxu0 0.0
    %55 = vmatpush1.msra.mxu0 0.0
    %56 = vmatprep.subr.mxu0 0.0
    %57 = vmatpush1.msra.mxu0 0.0
    %58 = vmatprep.subr.mxu0 0.0
    %59 = vmatpush1.msra.mxu0 0.0
    %60 = vmatprep.subr.mxu0 0.0
    %61 = vmatpush1.msra.mxu0 0.0
    %62 = vmatprep.subr.mxu0 0.0
    %63 = vmatpush1.msra.mxu0 0.0
    %64 = vmatprep.subr.mxu0 0.0
    %65 = vmatpush1.msra.mxu0 0.0
    %66 = vmatprep.subr.mxu0 0.0
    %67 = vmatpush1.msra.mxu0 0.0
    %68 = vmatprep.subr.mxu0 0.0
    %69 = vmatpush1.msra.mxu0 0.0
    %70 = vmatprep.subr.mxu0 0.0
    %71 = vmatpush1.msra.mxu0 0.0
    %72 = vmatprep.subr.mxu0 0.0
    %73 = vmatpush1.msra.mxu0 0.0
    %74 = vmatprep.subr.mxu0 0.0
    %75 = vmatpush1.msra.mxu0 0.0
    %76 = vmatprep.subr.mxu0 0.0
    %77 = vmatpush1.msra.mxu0 0.0
    %78 = vmatprep.subr.mxu0 0.0
    %79 = vmatpush1.msra.mxu0 0.0
    %80 = vmatprep.subr.mxu0 0.0
    %81 = vmatpush1.msra.mxu0 0.0
    %82 = vmatprep.subr.mxu0 0.0
    %83 = vmatpush1.msra.mxu0 0.0
    %84 = vmatprep.subr.mxu0 0.0
    %85 = vmatpush1.msra.mxu0 0.0
    %86 = vmatprep.mubr.f32.mxu0 0.0
    %87 = vmatmul.mubr.f32.gmra.mrb[0].mxu0 %v16
    %v88 = vpop.f32.mrb[0].mxu0
    %v89 = vadd.f32 0.0, %v88
    %v90 = vpop.f32.mrb[0].mxu0
    %91 = vdwg.mxu0
    %vm92 = vcmask 523264
    %93 = vst.msk [vmem:[#allocation2] sm:$0xff] %vm92, %v89
    // Predicated region
    $region10: #{tpu_custom_call.1} parent=1 // pred_check
      _
    $region11: #{tpu_custom_call.1} parent=1 // pred_check_branch
      %95 = sbr.rel (0) target = $region13
    $region12: #{tpu_custom_call.1} parent=1 // pred_region
      %s97 = ssub.s32 128, 128
      %98 = vsyncadd [#allocation3], %s97
      %s100 = sshll.u32 [#allocation2], 4
      %s101 = int_to_ptr.vmem [resolvable:$true] %s100
      %103 = dma.vmem_to_hbm [thread:$0]  %s101, 128, %s2, [#allocation3]
    $region13: #{tpu_custom_call.1} parent=1 // pred_fallthru
      _
    // Predicated region
    $region14: #{tpu_custom_call.1} parent=1 // pred_check
      _
    $region15: #{tpu_custom_call.1} parent=1 // pred_check_branch
      %105 = sbr.rel (0) target = $region17
    $region16: #{tpu_custom_call.1} parent=1 // pred_region
      %106 = dma.done [#allocation3], 128
    $region17: #{tpu_custom_call.1} parent=1 // pred_fallthru
      _
    %107 = vsyncpa [#allocation3], 1

</llo_original>
